<compile_context>
chip_gen: v7x
topology: tpu7x:2x2x1
jax: 0.10.0
libtpu: 0.0.40
codegen_flags: <defaults>
</compile_context>

<pallas_src>
import functools

import jax
import jax.numpy as jnp
from jax.experimental import pallas as pl
from jax.experimental.pallas import tpu as pltpu


def _round_up(n, m):
    return ((n + m - 1) // m) * m


# ----------------------------------------------------------------------------
# Pallas kernel: logits = x @ W^T + b ; emit log_softmax(logits) and logsumexp
# ----------------------------------------------------------------------------
def _categorical_kernel(x_ref, wt_ref, b_ref, logp_ref, lse_ref):
    # MXU matmul, f32 accumulation; bias broadcast over rows.
    logits = jnp.dot(
        x_ref[...], wt_ref[...], preferred_element_type=jnp.float32
    ) + b_ref[...]                                    # (TILE_B, O)

    # Numerically stable log-softmax along the last axis.
    m = jnp.max(logits, axis=-1, keepdims=True)       # (TILE_B, 1)
    shifted = logits - m
    e = jnp.exp(shifted)                              # EUP
    s = jnp.sum(e, axis=-1, keepdims=True)            # XLU reduce
    log_s = jnp.log(s)

    logp_ref[...] = (shifted - log_s).astype(logp_ref.dtype)   # normalized logits
    lse_ref[...] = (m + log_s).astype(lse_ref.dtype)           # logsumexp(raw logits)


@functools.partial(jax.jit, static_argnames=("tile_b",))
def categorical_forward(x, weight_t, bias, *, tile_b=None):
    """x: (B, K) f32; weight_t: (K, O) f32 (pre-transposed); bias: (O,) f32.

    Returns (logp, lse):
      logp: (B, O) normalized logits (log-probs)
      lse : (B, 1) logsumexp of the raw linear output
    Raw logits = logp + lse ; probs = exp(logp).
    """
    B, K = x.shape
    O = weight_t.shape[1]
    b2 = bias.reshape(1, O)

    if tile_b is None:
        # Big enough to feed the MXU / amortize the ~0.35us per-step cost,
        # small enough that double-buffered blocks stay far under any scoped
        # VMEM limit (v7x included).
        tile_b = min(512, _round_up(B, 8))
    tile_b = max(8, _round_up(tile_b, 8))

    Bp = _round_up(B, tile_b)
    if Bp != B:
        x = jnp.pad(x, ((0, Bp - B), (0, 0)))
    grid = (Bp // tile_b,)

    logp, lse = pl.pallas_call(
        _categorical_kernel,
        out_shape=(
            jax.ShapeDtypeStruct((Bp, O), jnp.float32),   # normalized logits
            jax.ShapeDtypeStruct((Bp, 1), jnp.float32),   # logsumexp column
        ),
        grid_spec=pltpu.PrefetchScalarGridSpec(
            num_scalar_prefetch=0,
            grid=grid,
            in_specs=[
                pl.BlockSpec((tile_b, K), lambda i: (i, 0)),   # x: batch-tiled
                pl.BlockSpec((K, O), lambda i: (0, 0)),        # W^T: resident
                pl.BlockSpec((1, O), lambda i: (0, 0)),        # bias: resident
            ],
            out_specs=[
                pl.BlockSpec((tile_b, O), lambda i: (i, 0)),
                pl.BlockSpec((tile_b, 1), lambda i: (i, 0)),
            ],
        ),
        compiler_params=pltpu.CompilerParams(
            dimension_semantics=("parallel",),     # megacore sharding on v7x
        ),
        cost_estimate=pl.CostEstimate(
            flops=2 * Bp * K * O,
            transcendentals=Bp * O,
            bytes_accessed=4 * (Bp * K + K * O + O + Bp * O + Bp),
        ),
    )(x, weight_t, b2)

    if Bp != B:
        logp = logp[:B]
        lse = lse[:B]
    return logp, lse


# ----------------------------------------------------------------------------
# Thin distribution wrapper mirroring FixedCategorical's interface
# ----------------------------------------------------------------------------
class FixedCategoricalJax:
    def __init__(self, logp, lse):
        self._logp = logp    # normalized (log-prob) logits, (B, O)
        self._lse = lse      # logsumexp of raw logits, (B, 1)

    @property
    def logits(self):
        # torch.distributions.Categorical(logits=l).logits == log_softmax(l)
        return self._logp

    @property
    def lse(self):
        return self._lse

    @property
    def probs(self):
        return jnp.exp(self._logp)

    def raw_logits(self):
        # Output of the linear layer, reconstructed lazily.
        return self._logp + self._lse

    def mode(self):
        return jnp.argmax(self._logp, axis=-1, keepdims=True)

    def log_probs(self, actions):
        a = jnp.squeeze(actions, axis=-1)
        lp = jnp.take_along_axis(self._logp, a[..., None], axis=-1)[..., 0]
        return lp.reshape(actions.shape[0], -1).sum(-1)[..., None]

    def sample(self, key):
        return jax.random.categorical(key, self._logp, axis=-1)[..., None]


class CategoricalPallas:
    """JAX/Pallas port of the PyTorch Categorical head."""

    def __init__(self, num_inputs, num_outputs, key, gain=0.01):
        # Deterministic orthogonal init (gain=0.01), bias = 0 — matches init_().
        a = jax.random.normal(key, (num_outputs, num_inputs), dtype=jnp.float32)
        if num_outputs < num_inputs:
            q, r = jnp.linalg.qr(a.T)
            q = q.T
        else:
            q, r = jnp.linalg.qr(a)
        d = jnp.diagonal(r)
        d = jnp.where(d == 0, 1.0, jnp.sign(d))
        q = q * d[:, None] if num_outputs >= num_inputs else q * d[None, :].T
        self.weight = (gain * q[:num_outputs, :num_inputs]).astype(jnp.float32)
        self.weight_t = jnp.asarray(self.weight.T)    # pre-transposed once
        self.bias = jnp.zeros((num_outputs,), dtype=jnp.float32)

    def __call__(self, x):
        logp, lse = categorical_forward(x, self.weight_t, self.bias)
        return FixedCategoricalJax(logp, lse)


# ----------------------------------------------------------------------------
if __name__ == "__main__":
    key = jax.random.PRNGKey(0)
    k_param, k_x, k_x2, k_sample = jax.random.split(key, 4)

    batch, num_inputs, num_outputs = 8, 32, 16
    module = CategoricalPallas(num_inputs, num_outputs, k_param)

    x = jax.random.normal(k_x, (batch, num_inputs), dtype=jnp.float32)
    dist = module(x)
    jax.block_until_ready((dist.logits, dist.lse))

    # Reference check against plain-JAX math.
    ref_logits = x @ module.weight.T + module.bias
    ref_logp = jax.nn.log_softmax(ref_logits, axis=-1)
    ref_probs = jax.nn.softmax(ref_logits, axis=-1)
    assert jnp.allclose(dist.raw_logits(), ref_logits, atol=1e-5, rtol=1e-5)
    assert jnp.allclose(dist.logits, ref_logp, atol=1e-5, rtol=1e-5)
    assert jnp.allclose(dist.probs, ref_probs, atol=1e-5, rtol=1e-5)

    # Exercise the multi-step grid + batch-padding path explicitly.
    x2 = jax.random.normal(k_x2, (40, num_inputs), dtype=jnp.float32)
    logp2, lse2 = categorical_forward(x2, module.weight_t, module.bias, tile_b=16)
    ref2 = jax.nn.log_softmax(x2 @ module.weight.T + module.bias, axis=-1)
    assert logp2.shape == (40, num_outputs)
    assert jnp.allclose(logp2, ref2, atol=1e-5, rtol=1e-5)

    # Exercise the distribution methods (sampling handled in plain JAX).
    mode = dist.mode()
    actions = dist.sample(k_sample)
    lp = dist.log_probs(actions)
    jax.block_until_ready((mode, actions, lp))

    print("KERNEL_OK")
</pallas_src>

<mosaic_0001>
module attributes {stable_mosaic.version = 11 : i64} {
  func.func @_categorical_kernel(%arg0: i32, %arg1: memref<8x32xf32, #tpu.memory_space<vmem>>, %arg2: memref<32x16xf32, #tpu.memory_space<vmem>>, %arg3: memref<1x16xf32, #tpu.memory_space<vmem>>, %arg4: memref<8x16xf32, #tpu.memory_space<vmem>>, %arg5: memref<8x1xf32, #tpu.memory_space<vmem>>) attributes {dimension_semantics = [#tpu.dimension_semantics<parallel>], iteration_bounds = array<i64: 1>, scalar_prefetch = 0 : i64, scratch_operands = 0 : i64, tpu.core_type = #tpu.core_type<tc>, window_params = [{transform_indices = @transform_0, window_bounds = array<i64: 8, 32>}, {pipeline_mode = #tpu.pipeline_mode<synchronous>, transform_indices = @transform_1, window_bounds = array<i64: 32, 16>}, {pipeline_mode = #tpu.pipeline_mode<synchronous>, transform_indices = @transform_2, window_bounds = array<i64: 1, 16>}, {transform_indices = @transform_3, window_bounds = array<i64: 8, 16>}, {transform_indices = @transform_4, window_bounds = array<i64: 8, 1>}]} {
    %c0 = arith.constant 0 : index
    %c0_0 = arith.constant 0 : index
    %0 = vector.load %arg1[%c0, %c0_0] : memref<8x32xf32, #tpu.memory_space<vmem>>, vector<8x32xf32>
    %c0_1 = arith.constant 0 : index
    %c0_2 = arith.constant 0 : index
    %1 = vector.load %arg2[%c0_1, %c0_2] : memref<32x16xf32, #tpu.memory_space<vmem>>, vector<32x16xf32>
    %cst = arith.constant dense<0.000000e+00> : vector<8x16xf32>
    %2 = tpu.matmul %0, %1, %cst {dimension_numbers = #tpu.dot_dimension_numbers<[1], [0], [0], [1], [0, 0, 1, 1], [], []>} : vector<8x32xf32>, vector<32x16xf32>, vector<8x16xf32> -> vector<8x16xf32>
    %c0_3 = arith.constant 0 : index
    %c0_4 = arith.constant 0 : index
    %3 = vector.load %arg3[%c0_3, %c0_4] : memref<1x16xf32, #tpu.memory_space<vmem>>, vector<1x16xf32>
    %4 = vector.broadcast %3 : vector<1x16xf32> to vector<8x16xf32>
    %5 = arith.addf %2, %4 : vector<8x16xf32>
    %cst_5 = arith.constant dense<0xFF800000> : vector<8xf32>
    %6 = vector.multi_reduction <maximumf>, %5, %cst_5 [1] : vector<8x16xf32> to vector<8xf32>
    %7 = vector.shape_cast %6 : vector<8xf32> to vector<8x1xf32>
    %8 = vector.broadcast %7 : vector<8x1xf32> to vector<8x16xf32>
    %9 = arith.subf %5, %8 : vector<8x16xf32>
    %10 = math.exp %9 : vector<8x16xf32>
    %cst_6 = arith.constant dense<0.000000e+00> : vector<8xf32>
    %11 = vector.multi_reduction <add>, %10, %cst_6 [1] : vector<8x16xf32> to vector<8xf32>
    %12 = vector.shape_cast %11 : vector<8xf32> to vector<8x1xf32>
    %13 = math.log %12 : vector<8x1xf32>
    %14 = vector.broadcast %13 : vector<8x1xf32> to vector<8x16xf32>
    %15 = arith.subf %9, %14 : vector<8x16xf32>
    %c0_7 = arith.constant 0 : index
    %c0_8 = arith.constant 0 : index
    %16 = vector.load %arg4[%c0_7, %c0_8] : memref<8x16xf32, #tpu.memory_space<vmem>>, vector<8x16xf32>
    tpu.vector_store %arg4[%c0_7, %c0_8], %15 {strides = array<i32>} : memref<8x16xf32, #tpu.memory_space<vmem>>, vector<8x16xf32>,
    %17 = arith.addf %7, %13 : vector<8x1xf32>
    %c0_9 = arith.constant 0 : index
    %c0_10 = arith.constant 0 : index
    %18 = vector.load %arg5[%c0_9, %c0_10] : memref<8x1xf32, #tpu.memory_space<vmem>>, vector<8x1xf32>
    tpu.vector_store %arg5[%c0_9, %c0_10], %17 {strides = array<i32>} : memref<8x1xf32, #tpu.memory_space<vmem>>, vector<8x1xf32>,
    return
  }
  func.func @transform_0(%arg0: i32) -> (i32, i32) {
    %c0_i32 = arith.constant 0 : i32
    %c0_i32_0 = arith.constant 0 : i32
    return %arg0, %c0_i32 : i32, i32
  }
  func.func @transform_1(%arg0: i32) -> (i32, i32) {
    %c0_i32 = arith.constant 0 : i32
    %c0_i32_0 = arith.constant 0 : i32
    %c0_i32_1 = arith.constant 0 : i32
    return %c0_i32, %c0_i32_0 : i32, i32
  }
  func.func @transform_2(%arg0: i32) -> (i32, i32) {
    %c0_i32 = arith.constant 0 : i32
    %c0_i32_0 = arith.constant 0 : i32
    %c0_i32_1 = arith.constant 0 : i32
    return %c0_i32, %c0_i32_0 : i32, i32
  }
  func.func @transform_3(%arg0: i32) -> (i32, i32) {
    %c0_i32 = arith.constant 0 : i32
    %c0_i32_0 = arith.constant 0 : i32
    return %arg0, %c0_i32 : i32, i32
  }
  func.func @transform_4(%arg0: i32) -> (i32, i32) {
    %c0_i32 = arith.constant 0 : i32
    %c0_i32_0 = arith.constant 0 : i32
    return %arg0, %c0_i32 : i32, i32
  }
}

</mosaic_0001>

<llo_original>
// kernel: categorical_forward.1
$region0: #{categorical_forward.1}
  #allocation0 [shape = 'u32[]', space=smem, size = 0x4, offset = 0x4, fixed_abs, tag = 'smem constant byte address 0x4 - core index']
  #allocation1 [shape = 'u32[144,128]{1,0:T(1,128)}', space=vmem, size = 0x12000, scoped, tag = 'internal scratch']
  %s0 = inlined_call_operand.vmem [shape: f32[8,32], index: 0, kind: input, shape index: {}]
  %s1 = inlined_call_operand.vmem [shape: f32[32,16], index: 1, kind: input, shape index: {}]
  %s2 = inlined_call_operand.vmem [shape: f32[1,16], index: 2, kind: input, shape index: {}]
  %s3 = inlined_call_operand.hbm [shape: f32[8,16], index: 3, kind: output, shape index: {0}]
  %s4 = inlined_call_operand.vmem [shape: f32[8,1], index: 4, kind: output, shape index: {1}]
  %5 = xla_tuple %s3, %s4
  %s6 = sld [smem:[#allocation0]]
  $region30: #{categorical_forward.1} parent=0
    _
  %s8 = ssub.s32 1, %s6
  %s9 = scalar_select 0, %s8, %s6
  $region1: #{categorical_forward.1} parent=0
    #allocation2 [shape = 'u8[4096]{0}', space=vmem, size = 0x1000, scoped, tag = 'output window, operand 0, single buffered']
    #allocation3 [shape = 's32[1]{0}', space=sflag, size = 0x4, scoped, tag = 'scoped memory for categorical_forward.1']
    %10 = vsyncpa [#allocation3], 0
    // Predicated region
    $region2: #{categorical_forward.1} parent=1 // pred_check
      _
    $region3: #{categorical_forward.1} parent=1 // pred_check_branch
      %12 = sbr.rel (0) target = $region5
    $region4: #{categorical_forward.1} parent=1 // pred_region
      _
    $region5: #{categorical_forward.1} parent=1 // pred_fallthru
      _
    // Predicated region
    $region6: #{categorical_forward.1} parent=1 // pred_check
      _
    $region7: #{categorical_forward.1} parent=1 // pred_check_branch
      %14 = sbr.rel (0) target = $region9
    $region8: #{categorical_forward.1} parent=1 // pred_region
      _
    $region9: #{categorical_forward.1} parent=1 // pred_fallthru
      _
    // Predicated region
    $region10: #{categorical_forward.1} parent=1 // pred_check
      _
    $region11: #{categorical_forward.1} parent=1 // pred_check_branch
      %16 = sbr.rel (0) target = $region13
    $region12: #{categorical_forward.1} parent=1 // pred_region
      _
    $region13: #{categorical_forward.1} parent=1 // pred_fallthru
      _
    %v17 = vld [vmem:[%s0] sm:$0xff]
    %v18 = vld [vmem:[%s1] sm:$0xff]
    %v19 = vld [vmem:[%s1 + $0x8] sm:$0xff]
    %v20 = vld [vmem:[%s1 + $0x10] sm:$0xff]
    %v21 = vld [vmem:[%s1 + $0x18] sm:$0xff]
    %v22 = vld [vmem:[%s2] sm:$0x1]
    %v24 = vlaneseq
    %v25 = vshrl.u32 %v24, 7
    %v26 = vsub.s32 0, %v25
    %v27 = vrot.slane %v22, %v26
    %vm29 = vcmask 261120
    %v31 = vsel %vm29, %v17, 0
    %33 = vmatprep.subr.mxu0 0.0
    %34 = vmatpush1.msra.mxu0 %v18
    %35 = vmatprep.subr.mxu0 0.0
    %36 = vmatpush1.msra.mxu0 %v19
    %37 = vmatprep.subr.mxu0 0.0
    %38 = vmatpush1.msra.mxu0 %v20
    %39 = vmatprep.subr.mxu0 0.0
    %40 = vmatpush1.msra.mxu0 %v21
    %41 = vmatprep.subr.mxu0 0.0
    %42 = vmatpush1.msra.mxu0 0.0
    %43 = vmatprep.subr.mxu0 0.0
    %44 = vmatpush1.msra.mxu0 0.0
    %45 = vmatprep.subr.mxu0 0.0
    %46 = vmatpush1.msra.mxu0 0.0
    %47 = vmatprep.subr.mxu0 0.0
    %48 = vmatpush1.msra.mxu0 0.0
    %49 = vmatprep.subr.mxu0 0.0
    %50 = vmatpush1.msra.mxu0 0.0
    %51 = vmatprep.subr.mxu0 0.0
    %52 = vmatpush1.msra.mxu0 0.0
    %53 = vmatprep.subr.mxu0 0.0
    %54 = vmatpush1.msra.mxu0 0.0
    %55 = vmatprep.subr.mxu0 0.0
    %56 = vmatpush1.msra.mxu0 0.0
    %57 = vmatprep.subr.mxu0 0.0
    %58 = vmatpush1.msra.mxu0 0.0
    %59 = vmatprep.subr.mxu0 0.0
    %60 = vmatpush1.msra.mxu0 0.0
    %61 = vmatprep.subr.mxu0 0.0
    %62 = vmatpush1.msra.mxu0 0.0
    %63 = vmatprep.subr.mxu0 0.0
    %64 = vmatpush1.msra.mxu0 0.0
    %65 = vmatprep.subr.mxu0 0.0
    %66 = vmatpush1.msra.mxu0 0.0
    %67 = vmatprep.subr.mxu0 0.0
    %68 = vmatpush1.msra.mxu0 0.0
    %69 = vmatprep.subr.mxu0 0.0
    %70 = vmatpush1.msra.mxu0 0.0
    %71 = vmatprep.subr.mxu0 0.0
    %72 = vmatpush1.msra.mxu0 0.0
    %73 = vmatprep.subr.mxu0 0.0
    %74 = vmatpush1.msra.mxu0 0.0
    %75 = vmatprep.subr.mxu0 0.0
    %76 = vmatpush1.msra.mxu0 0.0
    %77 = vmatprep.subr.mxu0 0.0
    %78 = vmatpush1.msra.mxu0 0.0
    %79 = vmatprep.subr.mxu0 0.0
    %80 = vmatpush1.msra.mxu0 0.0
    %81 = vmatprep.subr.mxu0 0.0
    %82 = vmatpush1.msra.mxu0 0.0
    %83 = vmatprep.subr.mxu0 0.0
    %84 = vmatpush1.msra.mxu0 0.0
    %85 = vmatprep.subr.mxu0 0.0
    %86 = vmatpush1.msra.mxu0 0.0
    %87 = vmatprep.subr.mxu0 0.0
    %88 = vmatpush1.msra.mxu0 0.0
    %89 = vmatprep.subr.mxu0 0.0
    %90 = vmatpush1.msra.mxu0 0.0
    %91 = vmatprep.subr.mxu0 0.0
    %92 = vmatpush1.msra.mxu0 0.0
    %93 = vmatprep.subr.mxu0 0.0
    %94 = vmatpush1.msra.mxu0 0.0
    %95 = vmatprep.subr.mxu0 0.0
    %96 = vmatpush1.msra.mxu0 0.0
    %97 = vmatprep.mubr.f32.mxu0 0.0
    %98 = vmatmul.mubr.f32.gmra.mrb[0].mxu0 %v31
    %v99 = vpop.f32.mrb[0].mxu0
    %v100 = vadd.f32 %v27, %v99
    %v101 = vpop.f32.mrb[0].mxu0
    %102 = vdwg.mxu0
    %vm103 = vcmask 130048
    %v104 = vsel %vm103, %v100, -inf
    %105 = vmax.xlane.f32.xlu0 %v104
    %v106 = vpop.xlane.xlu0 %105
    %v107 = vsub.f32 %v100, %v106
    %v108 = vmul.f32 %v107, 1.442695
    %v109 = vpow.pop %v108
    %v110 = vsel %vm103, %v109, 0.0
    %111 = vadd.xlane.f32.xlu0 %v110
    %v112 = vpop.xlane.xlu0 %111
    %v113 = vlog2.pop %v112
    %v114 = vmul.f32 %v113, 0.6931472
    %v115 = vsub.f32 %v107, %v114
    %116 = vst.msk [vmem:[#allocation2] sm:$0xff] %vm103, %v115
    %v117 = vadd.f32 %v106, %v114
    %vm118 = vcmask 7168
    %119 = vst.msk [vmem:[%s4] sm:$0xff] %vm118, %v117
    // Predicated region
    $region14: #{categorical_forward.1} parent=1 // pred_check
      _
    $region15: #{categorical_forward.1} parent=1 // pred_check_branch
      %121 = sbr.rel (0) target = $region17
    $region16: #{categorical_forward.1} parent=1 // pred_region
      %s123 = ssub.s32 128, 128
      %124 = vsyncadd [#allocation3], %s123
      %s126 = sshll.u32 [#allocation2], 4
      %s127 = int_to_ptr.vmem [resolvable:$true] %s126
      %129 = dma.vmem_to_hbm [thread:$0]  %s127, 128, %s3, [#allocation3]
    $region17: #{categorical_forward.1} parent=1 // pred_fallthru
      _
    // Predicated region
    $region18: #{categorical_forward.1} parent=1 // pred_check
      _
    $region19: #{categorical_forward.1} parent=1 // pred_check_branch
      %131 = sbr.rel (0) target = $region21
    $region20: #{categorical_forward.1} parent=1 // pred_region
      _
    $region21: #{categorical_forward.1} parent=1 // pred_fallthru
      _
    // Predicated region
    $region22: #{categorical_forward.1} parent=1 // pred_check
      _
    $region23: #{categorical_forward.1} parent=1 // pred_check_branch
      %133 = sbr.rel (0) target = $region25
    $region24: #{categorical_forward.1} parent=1 // pred_region
      %134 = dma.done [#allocation3], 128
    $region25: #{categorical_forward.1} parent=1 // pred_fallthru
      _
    // Predicated region
    $region26: #{categorical_forward.1} parent=1 // pred_check
      _
    $region27: #{categorical_forward.1} parent=1 // pred_check_branch
      %136 = sbr.rel (0) target = $region29
    $region28: #{categorical_forward.1} parent=1 // pred_region
      _
    $region29: #{categorical_forward.1} parent=1 // pred_fallthru
      _
    %137 = vsyncpa [#allocation3], 1

</llo_original>
